<compile_context>
chip_gen: v6e
topology: v6e:2x2x1
jax: 0.10.0
libtpu: 0.0.40
codegen_flags: <defaults>
</compile_context>

<pallas_src>
import jax
import jax.numpy as jnp
from jax.experimental import pallas as pl
from jax.experimental.pallas import tpu as pltpu

# ---- model hyper-params (consistent with the forward pass) ----
B = 2                      # batch used in the demo
L_IN = 20                  # conv1(k=10) -> 11 -> conv2(k=5) -> 7 (= LSTM input_size)
K1, K2 = 10, 5
L1 = L_IN - K1 + 1         # 11
L2 = L1 - K2 + 1           # 7
HIDDEN = 32                # lstm hidden size (constructor arg; 4H = 128 lanes)
H4 = 4 * HIDDEN            # 128
FC1_DIM, FC2_DIM, FC3_DIM = 64, 16, 1

# ---- kernel-side layout constants ----
LANE = 128
L_PAD = 32                 # x padded: cols 0:20 data, col 20 = 1.0 (bias), 21:32 = 0
W_ROWS = L_PAD + HIDDEN    # 64-row bf16 weight slab: rows 0:32 layer-1, 32:64 layer-2
MAX_B_TILE = 1024          # keeps per-step VMEM tiny even on v7x (64 MiB physical)


def _round_up(n, m):
    return ((n + m - 1) // m) * m


def cnn_lstm_kernel(x_ref, w_ref, p_ref, o_ref):
    """One batch tile.

    x_ref: (b_tile, 32) bf16   -- cols 0:20 input, col 20 == 1.0, cols 21:32 == 0
    w_ref: (64, 128)    bf16   -- rows 0:32 fused conv∘W_ih_l0 (+bias row 20, gate-permuted)
                                  rows 32:64 W_ih_l1^T (gate-permuted)
    p_ref: (8, 128)     f32    -- row 0 layer-2 gate bias, row 1[0:32] fused fc head,
                                  row 2[0] fused head bias
    o_ref: (1, 1, b_tile) f32  -- lane-dense over batch
    """
    x = x_ref[...]                                   # (b_tile, 32) bf16

    def lstm_cell(gates):
        # gate columns permuted host-side to [i | o | g | f]; f is dead (c0 = 0, seq_len = 1)
        so = jax.nn.sigmoid(gates[:, 0:2 * HIDDEN])          # i and o in one EUP pass
        gg = jnp.tanh(gates[:, 2 * HIDDEN:3 * HIDDEN])       # g
        return so[:, HIDDEN:2 * HIDDEN] * jnp.tanh(so[:, 0:HIDDEN] * gg)

    # layer 1: convs + bias folded into the input projection (bias via the 1.0 column)
    g1 = jnp.dot(x, w_ref[0:L_PAD, :], preferred_element_type=jnp.float32)   # (bt, 128) f32
    h1 = lstm_cell(g1)                                                        # (bt, 32)  f32

    # layer 2
    g2 = jnp.dot(h1.astype(jnp.bfloat16), w_ref[L_PAD:L_PAD + HIDDEN, :],
                 preferred_element_type=jnp.float32) + p_ref[0:1, :]          # (bt, 128) f32
    h2 = lstm_cell(g2)                                                        # (bt, 32)  f32

    # fused fc1->fc2->fc3 head, computed transposed so the store is lane-dense in batch
    whd = p_ref[1:2, 0:HIDDEN]                                                # (1, 32) f32
    y = jax.lax.dot_general(whd, h2, (((1,), (1,)), ((), ())),
                            preferred_element_type=jnp.float32)               # (1, bt)
    o_ref[...] = (y + p_ref[2:3, 0:1])[None]                                  # (1, 1, bt)


@jax.jit
def _forward_impl(x2d, wslab, pslab):
    b_actual = x2d.shape[0]

    # batch tiling: >=128 rows per tile (lane-dense output), >=2 grid steps when
    # the padded batch allows it (so the "parallel" axis can use both v7x TCs),
    # capped at MAX_B_TILE rows to keep per-step VMEM trivial.
    b128 = _round_up(max(b_actual, 1), LANE)
    if b128 <= LANE:
        b_tile = LANE
    else:
        b_tile = min(MAX_B_TILE, _round_up(b128 // 2, LANE))
    b_pad = _round_up(b128, b_tile)
    grid_len = b_pad // b_tile

    xp = jnp.zeros((b_pad, L_PAD), jnp.float32)
    xp = xp.at[:b_actual, :L_IN].set(x2d)
    xp = xp.at[:, L_IN].set(1.0)                 # bias column (layer-1 bias folded into W)
    xp = xp.astype(jnp.bfloat16)                 # bf16 MXU operand, halves x DMA bytes

    out = pl.pallas_call(
        cnn_lstm_kernel,
        out_shape=jax.ShapeDtypeStruct((grid_len, 1, b_tile), jnp.float32),
        grid_spec=pltpu.PrefetchScalarGridSpec(
            num_scalar_prefetch=0,
            grid=(grid_len,),
            in_specs=[
                pl.BlockSpec((b_tile, L_PAD), lambda i: (i, 0)),   # batch-tiled input
                pl.BlockSpec((W_ROWS, LANE), lambda i: (0, 0)),    # bf16 weight slab (resident)
                pl.BlockSpec((8, LANE), lambda i: (0, 0)),         # f32 bias/head slab (resident)
            ],
            out_specs=pl.BlockSpec((1, 1, b_tile), lambda i: (i, 0, 0)),
        ),
        compiler_params=pltpu.CompilerParams(
            dimension_semantics=("parallel",)),    # batch tiles shard across TCs (v7x)
    )(xp, wslab, pslab)

    # lane-dense output: flat index = tile * b_tile + lane = global batch index
    return out.reshape(b_pad, 1)[:b_actual]


def cnn_lstm_forward(x_ncw, params):
    """x_ncw: (B, 1, L_IN) float32, NCW like the PyTorch Conv1d input. Returns (B, 1)."""
    return _forward_impl(x_ncw[:, 0, :].astype(jnp.float32),
                         params["wslab"], params["pslab"])


# ---------------- host-side parameter construction / packing ----------------

def _toeplitz(w, in_len):
    """Valid-conv banded matrix C with (x @ C)[:, j] = sum_k x[:, j+k] * w[k]."""
    k = w.shape[0]
    out_len = in_len - k + 1
    c = jnp.zeros((in_len, out_len), dtype=jnp.float32)
    for j in range(out_len):
        c = c.at[j:j + k, j].set(w)
    return c


def make_params(key):
    ks = jax.random.split(key, 18)

    def rnd(k, shape, scale=0.2):
        return jax.random.normal(k, shape, dtype=jnp.float32) * scale

    # PyTorch-layout raw parameters (used by the pure-JAX reference)
    conv1_w = rnd(ks[0], (K1,)); conv1_b = rnd(ks[1], (1,))
    conv2_w = rnd(ks[2], (K2,)); conv2_b = rnd(ks[3], (1,))

    wih1 = rnd(ks[4], (H4, L2));     whh1 = rnd(ks[5], (H4, HIDDEN))
    bih1 = rnd(ks[6], (H4,));        bhh1 = rnd(ks[7], (H4,))
    wih2 = rnd(ks[8], (H4, HIDDEN)); whh2 = rnd(ks[9], (H4, HIDDEN))
    bih2 = rnd(ks[10], (H4,));       bhh2 = rnd(ks[11], (H4,))

    fw1 = rnd(ks[12], (FC1_DIM, HIDDEN)); fb1 = rnd(ks[13], (FC1_DIM,))
    fw2 = rnd(ks[14], (FC2_DIM, FC1_DIM)); fb2 = rnd(ks[15], (FC2_DIM,))
    fw3 = rnd(ks[16], (FC3_DIM, FC2_DIM)); fb3 = rnd(ks[17], (FC3_DIM,))

    # ---- fold conv1 ∘ conv2 ∘ W_ih_l0 into one (L_IN, 4H) projection ----
    c1 = _toeplitz(conv1_w, L_IN)                        # (20, 11)
    c2 = _toeplitz(conv2_w, L1)                          # (11, 7)
    c12 = c1 @ c2                                        # (20, 7)
    conv_bias = conv1_b[0] * (jnp.ones((1, L1)) @ c2) + conv2_b[0]   # (1, 7)

    wg1 = c12 @ wih1.T                                   # (20, 128)  torch gate order [i,f,g,o]
    bg1 = conv_bias @ wih1.T + (bih1 + bhh1)[None, :]    # (1, 128)
    wg2 = wih2.T                                         # (32, 128)
    bg2 = (bih2 + bhh2)[None, :]                         # (1, 128)

    # ---- permute gate columns [i,f,g,o] -> [i,o,g,f] (f is dead in-kernel) ----
    perm = jnp.concatenate([jnp.arange(0, HIDDEN),               # i
                            jnp.arange(3 * HIDDEN, 4 * HIDDEN),  # o
                            jnp.arange(2 * HIDDEN, 3 * HIDDEN),  # g
                            jnp.arange(HIDDEN, 2 * HIDDEN)])     # f (unused)
    wg1p, bg1p = wg1[:, perm], bg1[:, perm]
    wg2p, bg2p = wg2[:, perm], bg2[:, perm]

    # ---- fold fc1 -> fc2 -> fc3 (forward() has no activations between them) ----
    w_head = fw1.T @ fw2.T @ fw3.T                       # (32, 1)
    b_head = (fb1[None, :] @ fw2.T @ fw3.T
              + fb2[None, :] @ fw3.T + fb3[None, :])     # (1, 1)

    # ---- pack MXU weights into one lane-dense (64, 128) bf16 slab ----
    wslab = jnp.zeros((W_ROWS, LANE), jnp.float32)
    wslab = wslab.at[0:L_IN, :].set(wg1p)                # rows 0:20 fused conv/ih weights
    wslab = wslab.at[L_IN, :].set(bg1p[0])               # row 20: layer-1 bias (x col 20 == 1)
    wslab = wslab.at[L_PAD:L_PAD + HIDDEN, :].set(wg2p)  # rows 32:64 layer-2 ih weights
    wslab = wslab.astype(jnp.bfloat16)

    # ---- small f32 slab: layer-2 bias + fused head (kept full precision) ----
    pslab = jnp.zeros((8, LANE), jnp.float32)
    pslab = pslab.at[0, :].set(bg2p[0])
    pslab = pslab.at[1, 0:HIDDEN].set(w_head[:, 0])
    pslab = pslab.at[2, 0].set(b_head[0, 0])

    return {
        "wslab": wslab, "pslab": pslab,
        # raw PyTorch-style params for the reference
        "conv1_w": conv1_w, "conv1_b": conv1_b,
        "conv2_w": conv2_w, "conv2_b": conv2_b,
        "wih1": wih1, "whh1": whh1, "bih1": bih1, "bhh1": bhh1,
        "wih2": wih2, "whh2": whh2, "bih2": bih2, "bhh2": bhh2,
        "fw1": fw1, "fb1": fb1, "fw2": fw2, "fb2": fb2, "fw3": fw3, "fb3": fb3,
    }


def reference_forward(x_ncw, p):
    """Pure-JAX f32 reference mirroring the PyTorch module (full LSTM cell, 3 FCs)."""
    x = x_ncw[:, 0, :]
    y1 = p["conv1_b"][0] + sum(x[:, k:k + L1] * p["conv1_w"][k] for k in range(K1))
    y2 = p["conv2_b"][0] + sum(y1[:, k:k + L2] * p["conv2_w"][k] for k in range(K2))

    def cell(inp, wih, whh, bih, bhh):
        h = jnp.zeros((inp.shape[0], HIDDEN), jnp.float32)
        c = jnp.zeros((inp.shape[0], HIDDEN), jnp.float32)
        gates = inp @ wih.T + h @ whh.T + bih + bhh
        i = jax.nn.sigmoid(gates[:, :HIDDEN])
        f = jax.nn.sigmoid(gates[:, HIDDEN:2 * HIDDEN])
        g = jnp.tanh(gates[:, 2 * HIDDEN:3 * HIDDEN])
        o = jax.nn.sigmoid(gates[:, 3 * HIDDEN:])
        c = f * c + i * g
        return o * jnp.tanh(c)

    h1 = cell(y2, p["wih1"], p["whh1"], p["bih1"], p["bhh1"])
    h2 = cell(h1, p["wih2"], p["whh2"], p["bih2"], p["bhh2"])
    o1 = h2 @ p["fw1"].T + p["fb1"]
    o2 = o1 @ p["fw2"].T + p["fb2"]
    return o2 @ p["fw3"].T + p["fb3"]


if __name__ == "__main__":
    key = jax.random.PRNGKey(0)
    pkey, xkey = jax.random.split(key)
    params = make_params(pkey)
    x = jax.random.normal(xkey, (B, 1, L_IN), dtype=jnp.float32)   # NCW like PyTorch

    out = jax.block_until_ready(cnn_lstm_forward(x, params))

    ref = reference_forward(x, params)
    assert out.shape == (B, FC3_DIM), out.shape
    # bf16 MXU weights (per perf review) -> widened tolerance vs. the f32 reference.
    assert jnp.allclose(out, ref, rtol=1e-2, atol=1e-2), (out, ref)

    print("KERNEL_OK")
</pallas_src>

<mosaic_0001>
module attributes {stable_mosaic.version = 11 : i64} {
  func.func @cnn_lstm_kernel(%arg0: i32, %arg1: memref<128x32xbf16, #tpu.memory_space<vmem>>, %arg2: memref<64x128xbf16, #tpu.memory_space<vmem>>, %arg3: memref<8x128xf32, #tpu.memory_space<vmem>>, %arg4: memref<1x1x128xf32, #tpu.memory_space<vmem>>) attributes {dimension_semantics = [#tpu.dimension_semantics<parallel>], iteration_bounds = array<i64: 1>, scalar_prefetch = 0 : i64, scratch_operands = 0 : i64, tpu.core_type = #tpu.core_type<tc>, window_params = [{transform_indices = @transform_0, window_bounds = array<i64: 128, 32>}, {pipeline_mode = #tpu.pipeline_mode<synchronous>, transform_indices = @transform_1, window_bounds = array<i64: 64, 128>}, {pipeline_mode = #tpu.pipeline_mode<synchronous>, transform_indices = @transform_2, window_bounds = array<i64: 8, 128>}, {transform_indices = @transform_3, window_bounds = array<i64: 1, 1, 128>}]} {
    %c0 = arith.constant 0 : index
    %c0_0 = arith.constant 0 : index
    %0 = vector.load %arg1[%c0, %c0_0] : memref<128x32xbf16, #tpu.memory_space<vmem>>, vector<128x32xbf16>
    %c0_1 = arith.constant 0 : index
    %c0_2 = arith.constant 0 : index
    %1 = vector.load %arg2[%c0_1, %c0_2] : memref<64x128xbf16, #tpu.memory_space<vmem>>, vector<32x128xbf16>
    %cst = arith.constant dense<0.000000e+00> : vector<128x128xf32>
    %2 = tpu.matmul %0, %1, %cst {dimension_numbers = #tpu.dot_dimension_numbers<[1], [0], [0], [1], [0, 0, 1, 1], [], []>} : vector<128x32xbf16>, vector<32x128xbf16>, vector<128x128xf32> -> vector<128x128xf32>
    %3 = vector.extract_strided_slice %2 {offsets = [0, 0], sizes = [128, 64], strides = [1, 1]} : vector<128x128xf32> to vector<128x64xf32>
    %4 = arith.negf %3 : vector<128x64xf32>
    %5 = math.exp %4 : vector<128x64xf32>
    %cst_3 = arith.constant 1.000000e+00 : f32
    %6 = vector.broadcast %cst_3 : f32 to vector<128x64xf32>
    %7 = arith.addf %6, %5 : vector<128x64xf32>
    %8 = arith.divf %6, %7 : vector<128x64xf32>
    %9 = vector.extract_strided_slice %2 {offsets = [0, 64], sizes = [128, 32], strides = [1, 1]} : vector<128x128xf32> to vector<128x32xf32>
    %10 = math.tanh %9 : vector<128x32xf32>
    %11 = vector.extract_strided_slice %8 {offsets = [0, 32], sizes = [128, 32], strides = [1, 1]} : vector<128x64xf32> to vector<128x32xf32>
    %12 = vector.extract_strided_slice %8 {offsets = [0, 0], sizes = [128, 32], strides = [1, 1]} : vector<128x64xf32> to vector<128x32xf32>
    %13 = arith.mulf %12, %10 : vector<128x32xf32>
    %14 = math.tanh %13 : vector<128x32xf32>
    %15 = arith.mulf %11, %14 : vector<128x32xf32>
    %16 = arith.truncf %15 : vector<128x32xf32> to vector<128x32xbf16>
    %c32 = arith.constant 32 : index
    %c0_4 = arith.constant 0 : index
    %17 = vector.load %arg2[%c32, %c0_4] : memref<64x128xbf16, #tpu.memory_space<vmem>>, vector<32x128xbf16>
    %cst_5 = arith.constant dense<0.000000e+00> : vector<128x128xf32>
    %18 = tpu.matmul %16, %17, %cst_5 {dimension_numbers = #tpu.dot_dimension_numbers<[1], [0], [0], [1], [0, 0, 1, 1], [], []>} : vector<128x32xbf16>, vector<32x128xbf16>, vector<128x128xf32> -> vector<128x128xf32>
    %c0_6 = arith.constant 0 : index
    %c0_7 = arith.constant 0 : index
    %19 = vector.load %arg3[%c0_6, %c0_7] : memref<8x128xf32, #tpu.memory_space<vmem>>, vector<1x128xf32>
    %20 = vector.broadcast %19 : vector<1x128xf32> to vector<128x128xf32>
    %21 = arith.addf %18, %20 : vector<128x128xf32>
    %22 = vector.extract_strided_slice %21 {offsets = [0, 0], sizes = [128, 64], strides = [1, 1]} : vector<128x128xf32> to vector<128x64xf32>
    %23 = arith.negf %22 : vector<128x64xf32>
    %24 = math.exp %23 : vector<128x64xf32>
    %cst_8 = arith.constant 1.000000e+00 : f32
    %25 = vector.broadcast %cst_8 : f32 to vector<128x64xf32>
    %26 = arith.addf %25, %24 : vector<128x64xf32>
    %27 = arith.divf %25, %26 : vector<128x64xf32>
    %28 = vector.extract_strided_slice %21 {offsets = [0, 64], sizes = [128, 32], strides = [1, 1]} : vector<128x128xf32> to vector<128x32xf32>
    %29 = math.tanh %28 : vector<128x32xf32>
    %30 = vector.extract_strided_slice %27 {offsets = [0, 32], sizes = [128, 32], strides = [1, 1]} : vector<128x64xf32> to vector<128x32xf32>
    %31 = vector.extract_strided_slice %27 {offsets = [0, 0], sizes = [128, 32], strides = [1, 1]} : vector<128x64xf32> to vector<128x32xf32>
    %32 = arith.mulf %31, %29 : vector<128x32xf32>
    %33 = math.tanh %32 : vector<128x32xf32>
    %34 = arith.mulf %30, %33 : vector<128x32xf32>
    %c1 = arith.constant 1 : index
    %c0_9 = arith.constant 0 : index
    %35 = vector.load %arg3[%c1, %c0_9] : memref<8x128xf32, #tpu.memory_space<vmem>>, vector<1x32xf32>
    %cst_10 = arith.constant dense<0.000000e+00> : vector<1x128xf32>
    %36 = tpu.matmul %35, %34, %cst_10 {dimension_numbers = #tpu.dot_dimension_numbers<[1], [1], [0], [0], [0, 0, 1, 0], [], []>} : vector<1x32xf32>, vector<128x32xf32>, vector<1x128xf32> -> vector<1x128xf32>
    %c2 = arith.constant 2 : index
    %c0_11 = arith.constant 0 : index
    %37 = vector.load %arg3[%c2, %c0_11] : memref<8x128xf32, #tpu.memory_space<vmem>>, vector<1x1xf32>
    %38 = vector.broadcast %37 : vector<1x1xf32> to vector<1x128xf32>
    %39 = arith.addf %36, %38 : vector<1x128xf32>
    %40 = vector.shape_cast %39 : vector<1x128xf32> to vector<1x1x128xf32>
    %c0_12 = arith.constant 0 : index
    %c0_13 = arith.constant 0 : index
    %c0_14 = arith.constant 0 : index
    %41 = vector.load %arg4[%c0_12, %c0_13, %c0_14] : memref<1x1x128xf32, #tpu.memory_space<vmem>>, vector<1x1x128xf32>
    tpu.vector_store %arg4[%c0_12, %c0_13, %c0_14], %40 {strides = array<i32>} : memref<1x1x128xf32, #tpu.memory_space<vmem>>, vector<1x1x128xf32>,
    return
  }
  func.func @transform_0(%arg0: i32) -> (i32, i32) {
    %c0_i32 = arith.constant 0 : i32
    %c0_i32_0 = arith.constant 0 : i32
    return %arg0, %c0_i32 : i32, i32
  }
  func.func @transform_1(%arg0: i32) -> (i32, i32) {
    %c0_i32 = arith.constant 0 : i32
    %c0_i32_0 = arith.constant 0 : i32
    %c0_i32_1 = arith.constant 0 : i32
    return %c0_i32, %c0_i32_0 : i32, i32
  }
  func.func @transform_2(%arg0: i32) -> (i32, i32) {
    %c0_i32 = arith.constant 0 : i32
    %c0_i32_0 = arith.constant 0 : i32
    %c0_i32_1 = arith.constant 0 : i32
    return %c0_i32, %c0_i32_0 : i32, i32
  }
  func.func @transform_3(%arg0: i32) -> (i32, i32, i32) {
    %c0_i32 = arith.constant 0 : i32
    %c0_i32_0 = arith.constant 0 : i32
    %c0_i32_1 = arith.constant 0 : i32
    return %arg0, %c0_i32, %c0_i32_0 : i32, i32, i32
  }
}

</mosaic_0001>

<llo_original>
// kernel: _forward_impl.1
$region0: #{_forward_impl.1}
  #allocation0 [shape = 'u32[]', space=smem, size = 0x4, offset = 0x4, fixed_abs, tag = 'smem constant byte address 0x4 - core index']
  #allocation1 [shape = 'u32[144,128]{1,0:T(1,128)}', space=vmem, size = 0x12000, scoped, tag = 'internal scratch']
  %s0 = inlined_call_operand.vmem [shape: bf16[128,32], index: 0, kind: input, shape index: {}]
  %s1 = inlined_call_operand.vmem [shape: bf16[64,128], index: 1, kind: input, shape index: {}]
  %s2 = inlined_call_operand.vmem [shape: f32[8,128], index: 2, kind: input, shape index: {}]
  %s3 = inlined_call_operand.vmem [shape: f32[1,1,128], index: 3, kind: output, shape index: {}]
  %s4 = sld [smem:[#allocation0]]
  $region22: #{_forward_impl.1} parent=0
    _
  %s6 = ssub.s32 1, %s4
  %s7 = scalar_select 0, %s6, %s4
  // Predicated region
  $region2: #{_forward_impl.1} parent=0 // pred_check
    _
  $region3: #{_forward_impl.1} parent=0 // pred_check_branch
    %9 = sbr.rel (0) target = $region5
  $region4: #{_forward_impl.1} parent=0 // pred_region
    _
  $region5: #{_forward_impl.1} parent=0 // pred_fallthru
    _
  // Predicated region
  $region6: #{_forward_impl.1} parent=0 // pred_check
    _
  $region7: #{_forward_impl.1} parent=0 // pred_check_branch
    %11 = sbr.rel (0) target = $region9
  $region8: #{_forward_impl.1} parent=0 // pred_region
    _
  $region9: #{_forward_impl.1} parent=0 // pred_fallthru
    _
  // Predicated region
  $region10: #{_forward_impl.1} parent=0 // pred_check
    _
  $region11: #{_forward_impl.1} parent=0 // pred_check_branch
    %13 = sbr.rel (0) target = $region13
  $region12: #{_forward_impl.1} parent=0 // pred_region
    _
  $region13: #{_forward_impl.1} parent=0 // pred_fallthru
    _
  %v15 = vld [vmem:[%s0] sm:$0xf]
  %v16 = vld [vmem:[%s0 + $0x4] sm:$0xf]
  %v17 = vld [vmem:[%s0 + $0x8] sm:$0xf]
  %v18 = vld [vmem:[%s0 + $0xc] sm:$0xf]
  %v19 = vld [vmem:[%s0 + $0x10] sm:$0xf]
  %v20 = vld [vmem:[%s0 + $0x14] sm:$0xf]
  %v21 = vld [vmem:[%s0 + $0x18] sm:$0xf]
  %v22 = vld [vmem:[%s0 + $0x1c] sm:$0xf]
  %v23 = vld [vmem:[%s0 + $0x20] sm:$0xf]
  %v24 = vld [vmem:[%s0 + $0x24] sm:$0xf]
  %v25 = vld [vmem:[%s0 + $0x28] sm:$0xf]
  %v26 = vld [vmem:[%s0 + $0x2c] sm:$0xf]
  %v27 = vld [vmem:[%s0 + $0x30] sm:$0xf]
  %v28 = vld [vmem:[%s0 + $0x34] sm:$0xf]
  %v29 = vld [vmem:[%s0 + $0x38] sm:$0xf]
  %v30 = vld [vmem:[%s0 + $0x3c] sm:$0xf]
  %v31 = vld [vmem:[%s1] sm:$0xf]
  %v32 = vld [vmem:[%s1 + $0x4] sm:$0xf]
  %v33 = vld [vmem:[%s1 + $0x8] sm:$0xf]
  %v34 = vld [vmem:[%s1 + $0xc] sm:$0xf]
  %v51 = vunpack.c.l.b16 %v15
  %v52 = vunpack.c.l.b16 %v16
  %v53 = vunpack.c.l.b16 %v17
  %v54 = vunpack.c.l.b16 %v18
  %v55 = vunpack.c.l.b16 %v19
  %v56 = vunpack.c.l.b16 %v20
  %v57 = vunpack.c.l.b16 %v21
  %v58 = vunpack.c.l.b16 %v22
  %v59 = vunpack.c.l.b16 %v23
  %v60 = vunpack.c.l.b16 %v24
  %v61 = vunpack.c.l.b16 %v25
  %v62 = vunpack.c.l.b16 %v26
  %v63 = vunpack.c.l.b16 %v27
  %v64 = vunpack.c.l.b16 %v28
  %v65 = vunpack.c.l.b16 %v29
  %v66 = vunpack.c.l.b16 %v30
  %v67 = vpack.c.b16 %v52, %v51
  %v68 = vpack.c.b16 %v54, %v53
  %v69 = vpack.c.b16 %v56, %v55
  %v70 = vpack.c.b16 %v58, %v57
  %v71 = vpack.c.b16 %v60, %v59
  %v72 = vpack.c.b16 %v62, %v61
  %v73 = vpack.c.b16 %v64, %v63
  %v74 = vpack.c.b16 %v66, %v65
  %v79 = vunpack.c.l.b16 %v31
  %v80 = vunpack.c.l.b16 %v32
  %v81 = vunpack.c.l.b16 %v33
  %v82 = vunpack.c.l.b16 %v34
  %v83 = vpack.c.b16 %v80, %v79
  %v84 = vpack.c.b16 %v82, %v81
  %vm87 = vcmask 261120
  %v89 = vsel %vm87, %v67, 0
  %v92 = vsel %vm87, %v68, 0
  %v95 = vsel %vm87, %v69, 0
  %v98 = vsel %vm87, %v70, 0
  %v101 = vsel %vm87, %v71, 0
  %v104 = vsel %vm87, %v72, 0
  %v107 = vsel %vm87, %v73, 0
  %v110 = vsel %vm87, %v74, 0
  %112 = vmatprep.subr.bf16.mxu0 0
  %113 = vmatpush1.bf16.msra.mxu0 0
  %114 = vmatprep.subr.bf16.mxu0 0
  %115 = vmatpush1.bf16.msra.mxu0 0
  %116 = vmatprep.subr.bf16.mxu0 0
  %117 = vmatpush1.bf16.msra.mxu0 0
  %118 = vmatprep.subr.bf16.mxu0 0
  %119 = vmatpush1.bf16.msra.mxu0 0
  %120 = vmatprep.subr.bf16.mxu0 0
  %121 = vmatpush1.bf16.msra.mxu0 0
  %122 = vmatprep.subr.bf16.mxu0 0
  %123 = vmatpush1.bf16.msra.mxu0 0
  %124 = vmatprep.subr.bf16.mxu0 0
  %125 = vmatpush1.bf16.msra.mxu0 %v84
  %126 = vmatprep.subr.bf16.mxu0 0
  %127 = vmatpush1.bf16.msra.mxu0 %v83
  %128 = vmatprep.subr.bf16.mxu0 0
  %129 = vmatpush2.bf16.msra.mxu0 0
  %130 = vmatprep.subr.bf16.mxu0 0
  %131 = vmatpush2.bf16.msra.mxu0 0
  %132 = vmatprep.subr.bf16.mxu0 0
  %133 = vmatpush2.bf16.msra.mxu0 0
  %134 = vmatprep.subr.bf16.mxu0 0
  %135 = vmatpush2.bf16.msra.mxu0 0
  %136 = vmatprep.subr.bf16.mxu0 0
  %137 = vmatpush2.bf16.msra.mxu0 0
  %138 = vmatprep.subr.bf16.mxu0 0
  %139 = vmatpush2.bf16.msra.mxu0 0
  %140 = vmatprep.subr.bf16.mxu0 0
  %141 = vmatpush2.bf16.msra.mxu0 0
  %142 = vmatprep.subr.bf16.mxu0 0
  %143 = vmatpush2.bf16.msra.mxu0 0
  %144 = vmatprep.mubr.bf16.mxu0 0
  %145 = vmatmul.mubr.bf16.gmra.mxu0 %v89
  %v146 = vpop.f32.mrf.mxu0
  %v147 = vadd.f32 0.0, %v146
  %v148 = vpop.f32.mrf.mxu0
  %v149 = vpop.f32.mrf.mxu0
  %v150 = vadd.f32 0.0, %v149
  %v151 = vpop.f32.mrf.mxu0
  %152 = vmatprep.mubr.bf16.mxu0 0
  %153 = vmatmul.mubr.bf16.gmra.mxu0 %v92
  %v154 = vpop.f32.mrf.mxu0
  %v155 = vadd.f32 0.0, %v154
  %v156 = vpop.f32.mrf.mxu0
  %v157 = vpop.f32.mrf.mxu0
  %v158 = vadd.f32 0.0, %v157
  %v159 = vpop.f32.mrf.mxu0
  %160 = vmatprep.mubr.bf16.mxu0 0
  %161 = vmatmul.mubr.bf16.gmra.mxu0 %v95
  %v162 = vpop.f32.mrf.mxu0
  %v163 = vadd.f32 0.0, %v162
  %v164 = vpop.f32.mrf.mxu0
  %v165 = vpop.f32.mrf.mxu0
  %v166 = vadd.f32 0.0, %v165
  %v167 = vpop.f32.mrf.mxu0
  %168 = vmatprep.mubr.bf16.mxu0 0
  %169 = vmatmul.mubr.bf16.gmra.mxu0 %v98
  %v170 = vpop.f32.mrf.mxu0
  %v171 = vadd.f32 0.0, %v170
  %v172 = vpop.f32.mrf.mxu0
  %v173 = vpop.f32.mrf.mxu0
  %v174 = vadd.f32 0.0, %v173
  %v175 = vpop.f32.mrf.mxu0
  %176 = vmatprep.mubr.bf16.mxu0 0
  %177 = vmatmul.mubr.bf16.gmra.mxu0 %v101
  %v178 = vpop.f32.mrf.mxu0
  %v179 = vadd.f32 0.0, %v178
  %v180 = vpop.f32.mrf.mxu0
  %v181 = vpop.f32.mrf.mxu0
  %v182 = vadd.f32 0.0, %v181
  %v183 = vpop.f32.mrf.mxu0
  %184 = vmatprep.mubr.bf16.mxu0 0
  %185 = vmatmul.mubr.bf16.gmra.mxu0 %v104
  %v186 = vpop.f32.mrf.mxu0
  %v187 = vadd.f32 0.0, %v186
  %v188 = vpop.f32.mrf.mxu0
  %v189 = vpop.f32.mrf.mxu0
  %v190 = vadd.f32 0.0, %v189
  %v191 = vpop.f32.mrf.mxu0
  %192 = vmatprep.mubr.bf16.mxu0 0
  %193 = vmatmul.mubr.bf16.gmra.mxu0 %v107
  %v194 = vpop.f32.mrf.mxu0
  %v195 = vadd.f32 0.0, %v194
  %v196 = vpop.f32.mrf.mxu0
  %v197 = vpop.f32.mrf.mxu0
  %v198 = vadd.f32 0.0, %v197
  %v199 = vpop.f32.mrf.mxu0
  %200 = vmatprep.mubr.bf16.mxu0 0
  %201 = vmatmul.mubr.bf16.gmra.mxu0 %v110
  %v202 = vpop.f32.mrf.mxu0
  %v203 = vadd.f32 0.0, %v202
  %v204 = vpop.f32.mrf.mxu0
  %v205 = vpop.f32.mrf.mxu0
  %v206 = vadd.f32 0.0, %v205
  %v207 = vpop.f32.mrf.mxu0
  %208 = vdwg.mxu0
  %v209 = vxor.u32 %v147, 2147483648
  %v210 = vxor.u32 %v150, 2147483648
  %v211 = vxor.u32 %v155, 2147483648
  %v212 = vxor.u32 %v158, 2147483648
  %v213 = vxor.u32 %v163, 2147483648
  %v214 = vxor.u32 %v166, 2147483648
  %v215 = vxor.u32 %v171, 2147483648
  %v216 = vxor.u32 %v174, 2147483648
  %v217 = vxor.u32 %v179, 2147483648
  %v218 = vxor.u32 %v182, 2147483648
  %v219 = vxor.u32 %v187, 2147483648
  %v220 = vxor.u32 %v190, 2147483648
  %v221 = vxor.u32 %v195, 2147483648
  %v222 = vxor.u32 %v198, 2147483648
  %v223 = vxor.u32 %v203, 2147483648
  %v224 = vxor.u32 %v206, 2147483648
  %v225 = vmul.f32 %v209, 1.442695
  %v226 = vpow.pop %v225
  %v227 = vmul.f32 %v210, 1.442695
  %v228 = vpow.pop %v227
  %v229 = vmul.f32 %v211, 1.442695
  %v230 = vpow.pop %v229
  %v231 = vmul.f32 %v212, 1.442695
  %v232 = vpow.pop %v231
  %v233 = vmul.f32 %v213, 1.442695
  %v234 = vpow.pop %v233
  %v235 = vmul.f32 %v214, 1.442695
  %v236 = vpow.pop %v235
  %v237 = vmul.f32 %v215, 1.442695
  %v238 = vpow.pop %v237
  %v239 = vmul.f32 %v216, 1.442695
  %v240 = vpow.pop %v239
  %v241 = vmul.f32 %v217, 1.442695
  %v242 = vpow.pop %v241
  %v243 = vmul.f32 %v218, 1.442695
  %v244 = vpow.pop %v243
  %v245 = vmul.f32 %v219, 1.442695
  %v246 = vpow.pop %v245
  %v247 = vmul.f32 %v220, 1.442695
  %v248 = vpow.pop %v247
  %v249 = vmul.f32 %v221, 1.442695
  %v250 = vpow.pop %v249
  %v251 = vmul.f32 %v222, 1.442695
  %v252 = vpow.pop %v251
  %v253 = vmul.f32 %v223, 1.442695
  %v254 = vpow.pop %v253
  %v255 = vmul.f32 %v224, 1.442695
  %v256 = vpow.pop %v255
  %v257 = vadd.f32 %v226, 1.0
  %v258 = vadd.f32 %v228, 1.0
  %v259 = vadd.f32 %v230, 1.0
  %v260 = vadd.f32 %v232, 1.0
  %v261 = vadd.f32 %v234, 1.0
  %v262 = vadd.f32 %v236, 1.0
  %v263 = vadd.f32 %v238, 1.0
  %v264 = vadd.f32 %v240, 1.0
  %v265 = vadd.f32 %v242, 1.0
  %v266 = vadd.f32 %v244, 1.0
  %v267 = vadd.f32 %v246, 1.0
  %v268 = vadd.f32 %v248, 1.0
  %v269 = vadd.f32 %v250, 1.0
  %v270 = vadd.f32 %v252, 1.0
  %v271 = vadd.f32 %v254, 1.0
  %v272 = vadd.f32 %v256, 1.0
  %v273 = vrcp.pop %v257
  %v274 = vmul.f32 1.0, %v273
  %v275 = vrcp.pop %v258
  %v276 = vmul.f32 1.0, %v275
  %v277 = vrcp.pop %v259
  %v278 = vmul.f32 1.0, %v277
  %v279 = vrcp.pop %v260
  %v280 = vmul.f32 1.0, %v279
  %v281 = vrcp.pop %v261
  %v282 = vmul.f32 1.0, %v281
  %v283 = vrcp.pop %v262
  %v284 = vmul.f32 1.0, %v283
  %v285 = vrcp.pop %v263
  %v286 = vmul.f32 1.0, %v285
  %v287 = vrcp.pop %v264
  %v288 = vmul.f32 1.0, %v287
  %v289 = vrcp.pop %v265
  %v290 = vmul.f32 1.0, %v289
  %v291 = vrcp.pop %v266
  %v292 = vmul.f32 1.0, %v291
  %v293 = vrcp.pop %v267
  %v294 = vmul.f32 1.0, %v293
  %v295 = vrcp.pop %v268
  %v296 = vmul.f32 1.0, %v295
  %v297 = vrcp.pop %v269
  %v298 = vmul.f32 1.0, %v297
  %v299 = vrcp.pop %v270
  %v300 = vmul.f32 1.0, %v299
  %v301 = vrcp.pop %v271
  %v302 = vmul.f32 1.0, %v301
  %v303 = vrcp.pop %v272
  %v304 = vmul.f32 1.0, %v303
  %v305 = vtanh.pop %v147
  %v306 = vtanh.pop %v150
  %v307 = vtanh.pop %v155
  %v308 = vtanh.pop %v158
  %v309 = vtanh.pop %v163
  %v310 = vtanh.pop %v166
  %v311 = vtanh.pop %v171
  %v312 = vtanh.pop %v174
  %v313 = vtanh.pop %v179
  %v314 = vtanh.pop %v182
  %v315 = vtanh.pop %v187
  %v316 = vtanh.pop %v190
  %v317 = vtanh.pop %v195
  %v318 = vtanh.pop %v198
  %v319 = vtanh.pop %v203
  %v320 = vtanh.pop %v206
  %337 = vrot.lane.b32.xlu0 %v305, 64
  %v338 = vpop.permute.xlu0 %337
  %339 = vrot.lane.b32.xlu0 %v306, 64
  %v340 = vpop.permute.xlu0 %339
  %341 = vrot.lane.b32.xlu0 %v307, 64
  %v342 = vpop.permute.xlu0 %341
  %343 = vrot.lane.b32.xlu0 %v308, 64
  %v344 = vpop.permute.xlu0 %343
  %345 = vrot.lane.b32.xlu0 %v309, 64
  %v346 = vpop.permute.xlu0 %345
  %347 = vrot.lane.b32.xlu0 %v310, 64
  %v348 = vpop.permute.xlu0 %347
  %349 = vrot.lane.b32.xlu0 %v311, 64
  %v350 = vpop.permute.xlu0 %349
  %351 = vrot.lane.b32.xlu0 %v312, 64
  %v352 = vpop.permute.xlu0 %351
  %353 = vrot.lane.b32.xlu0 %v313, 64
  %v354 = vpop.permute.xlu0 %353
  %355 = vrot.lane.b32.xlu0 %v314, 64
  %v356 = vpop.permute.xlu0 %355
  %357 = vrot.lane.b32.xlu0 %v315, 64
  %v358 = vpop.permute.xlu0 %357
  %359 = vrot.lane.b32.xlu0 %v316, 64
  %v360 = vpop.permute.xlu0 %359
  %361 = vrot.lane.b32.xlu0 %v317, 64
  %v362 = vpop.permute.xlu0 %361
  %363 = vrot.lane.b32.xlu0 %v318, 64
  %v364 = vpop.permute.xlu0 %363
  %365 = vrot.lane.b32.xlu0 %v319, 64
  %v366 = vpop.permute.xlu0 %365
  %367 = vrot.lane.b32.xlu0 %v320, 64
  %v368 = vpop.permute.xlu0 %367
  %v385 = vmul.f32 %v274, %v338
  %v386 = vmul.f32 %v276, %v340
  %v387 = vmul.f32 %v278, %v342
  %v388 = vmul.f32 %v280, %v344
  %v389 = vmul.f32 %v282, %v346
  %v390 = vmul.f32 %v284, %v348
  %v391 = vmul.f32 %v286, %v350
  %v392 = vmul.f32 %v288, %v352
  %v393 = vmul.f32 %v290, %v354
  %v394 = vmul.f32 %v292, %v356
  %v395 = vmul.f32 %v294, %v358
  %v396 = vmul.f32 %v296, %v360
  %v397 = vmul.f32 %v298, %v362
  %v398 = vmul.f32 %v300, %v364
  %v399 = vmul.f32 %v302, %v366
  %v400 = vmul.f32 %v304, %v368
  %v401 = vtanh.pop %v385
  %v402 = vtanh.pop %v386
  %v403 = vtanh.pop %v387
  %v404 = vtanh.pop %v388
  %v405 = vtanh.pop %v389
  %v406 = vtanh.pop %v390
  %v407 = vtanh.pop %v391
  %v408 = vtanh.pop %v392
  %v409 = vtanh.pop %v393
  %v410 = vtanh.pop %v394
  %v411 = vtanh.pop %v395
  %v412 = vtanh.pop %v396
  %v413 = vtanh.pop %v397
  %v414 = vtanh.pop %v398
  %v415 = vtanh.pop %v399
  %v416 = vtanh.pop %v400
  %433 = vrot.lane.b32.xlu0 %v401, 32
  %v434 = vpop.permute.xlu0 %433
  %435 = vrot.lane.b32.xlu0 %v402, 32
  %v436 = vpop.permute.xlu0 %435
  %437 = vrot.lane.b32.xlu0 %v403, 32
  %v438 = vpop.permute.xlu0 %437
  %439 = vrot.lane.b32.xlu0 %v404, 32
  %v440 = vpop.permute.xlu0 %439
  %441 = vrot.lane.b32.xlu0 %v405, 32
  %v442 = vpop.permute.xlu0 %441
  %443 = vrot.lane.b32.xlu0 %v406, 32
  %v444 = vpop.permute.xlu0 %443
  %445 = vrot.lane.b32.xlu0 %v407, 32
  %v446 = vpop.permute.xlu0 %445
  %447 = vrot.lane.b32.xlu0 %v408, 32
  %v448 = vpop.permute.xlu0 %447
  %449 = vrot.lane.b32.xlu0 %v409, 32
  %v450 = vpop.permute.xlu0 %449
  %451 = vrot.lane.b32.xlu0 %v410, 32
  %v452 = vpop.permute.xlu0 %451
  %453 = vrot.lane.b32.xlu0 %v411, 32
  %v454 = vpop.permute.xlu0 %453
  %455 = vrot.lane.b32.xlu0 %v412, 32
  %v456 = vpop.permute.xlu0 %455
  %457 = vrot.lane.b32.xlu0 %v413, 32
  %v458 = vpop.permute.xlu0 %457
  %459 = vrot.lane.b32.xlu0 %v414, 32
  %v460 = vpop.permute.xlu0 %459
  %461 = vrot.lane.b32.xlu0 %v415, 32
  %v462 = vpop.permute.xlu0 %461
  %463 = vrot.lane.b32.xlu0 %v416, 32
  %v464 = vpop.permute.xlu0 %463
  %v481 = vmul.f32 %v274, %v434
  %v482 = vmul.f32 %v276, %v436
  %v483 = vmul.f32 %v278, %v438
  %v484 = vmul.f32 %v280, %v440
  %v485 = vmul.f32 %v282, %v442
  %v486 = vmul.f32 %v284, %v444
  %v487 = vmul.f32 %v286, %v446
  %v488 = vmul.f32 %v288, %v448
  %v489 = vmul.f32 %v290, %v450
  %v490 = vmul.f32 %v292, %v452
  %v491 = vmul.f32 %v294, %v454
  %v492 = vmul.f32 %v296, %v456
  %v493 = vmul.f32 %v298, %v458
  %v494 = vmul.f32 %v300, %v460
  %v495 = vmul.f32 %v302, %v462
  %v496 = vmul.f32 %v304, %v464
  %v497 = vpack.c.bf16 %v482, %v481
  %v498 = vpack.c.bf16 %v484, %v483
  %v499 = vpack.c.bf16 %v486, %v485
  %v500 = vpack.c.bf16 %v488, %v487
  %v501 = vpack.c.bf16 %v490, %v489
  %v502 = vpack.c.bf16 %v492, %v491
  %v503 = vpack.c.bf16 %v494, %v493
  %v504 = vpack.c.bf16 %v496, %v495
  %v505 = vld [vmem:[%s1 + $0x10] sm:$0xf]
  %v506 = vld [vmem:[%s1 + $0x14] sm:$0xf]
  %v507 = vld [vmem:[%s1 + $0x18] sm:$0xf]
  %v508 = vld [vmem:[%s1 + $0x1c] sm:$0xf]
  %v509 = vld [vmem:[%s2] sm:$0x1]
  %v510 = vlaneseq
  %v511 = vshrl.u32 %v510, 7
  %v512 = vsub.s32 0, %v511
  %v513 = vrot.slane %v509, %v512
  %522 = vrot.lane.b32.xlu0 %v497, 96
  %v523 = vpop.permute.xlu0 %522
  %524 = vrot.lane.b32.xlu0 %v498, 96
  %v525 = vpop.permute.xlu0 %524
  %526 = vrot.lane.b32.xlu0 %v499, 96
  %v527 = vpop.permute.xlu0 %526
  %528 = vrot.lane.b32.xlu0 %v500, 96
  %v529 = vpop.permute.xlu0 %528
  %530 = vrot.lane.b32.xlu0 %v501, 96
  %v531 = vpop.permute.xlu0 %530
  %532 = vrot.lane.b32.xlu0 %v502, 96
  %v533 = vpop.permute.xlu0 %532
  %534 = vrot.lane.b32.xlu0 %v503, 96
  %v535 = vpop.permute.xlu0 %534
  %536 = vrot.lane.b32.xlu0 %v504, 96
  %v537 = vpop.permute.xlu0 %536
  %v542 = vunpack.c.l.b16 %v505
  %v543 = vunpack.c.l.b16 %v506
  %v544 = vunpack.c.l.b16 %v507
  %v545 = vunpack.c.l.b16 %v508
  %v546 = vpack.c.b16 %v543, %v542
  %v547 = vpack.c.b16 %v545, %v544
  %v551 = vsel %vm87, %v523, 0
  %v554 = vsel %vm87, %v525, 0
  %v557 = vsel %vm87, %v527, 0
  %v560 = vsel %vm87, %v529, 0
  %v563 = vsel %vm87, %v531, 0
  %v566 = vsel %vm87, %v533, 0
  %v569 = vsel %vm87, %v535, 0
  %v572 = vsel %vm87, %v537, 0
  %574 = vmatprep.subr.bf16.mxu0 0
  %575 = vmatpush1.bf16.msra.mxu0 0
  %576 = vmatprep.subr.bf16.mxu0 0
  %577 = vmatpush1.bf16.msra.mxu0 0
  %578 = vmatprep.subr.bf16.mxu0 0
  %579 = vmatpush1.bf16.msra.mxu0 0
  %580 = vmatprep.subr.bf16.mxu0 0
  %581 = vmatpush1.bf16.msra.mxu0 0
  %582 = vmatprep.subr.bf16.mxu0 0
  %583 = vmatpush1.bf16.msra.mxu0 0
  %584 = vmatprep.subr.bf16.mxu0 0
  %585 = vmatpush1.bf16.msra.mxu0 0
  %586 = vmatprep.subr.bf16.mxu0 0
  %587 = vmatpush1.bf16.msra.mxu0 %v547
  %588 = vmatprep.subr.bf16.mxu0 0
  %589 = vmatpush1.bf16.msra.mxu0 %v546
  %590 = vmatprep.subr.bf16.mxu0 0
  %591 = vmatpush2.bf16.msra.mxu0 0
  %592 = vmatprep.subr.bf16.mxu0 0
  %593 = vmatpush2.bf16.msra.mxu0 0
  %594 = vmatprep.subr.bf16.mxu0 0
  %595 = vmatpush2.bf16.msra.mxu0 0
  %596 = vmatprep.subr.bf16.mxu0 0
  %597 = vmatpush2.bf16.msra.mxu0 0
  %598 = vmatprep.subr.bf16.mxu0 0
  %599 = vmatpush2.bf16.msra.mxu0 0
  %600 = vmatprep.subr.bf16.mxu0 0
  %601 = vmatpush2.bf16.msra.mxu0 0
  %602 = vmatprep.subr.bf16.mxu0 0
  %603 = vmatpush2.bf16.msra.mxu0 0
  %604 = vmatprep.subr.bf16.mxu0 0
  %605 = vmatpush2.bf16.msra.mxu0 0
  %606 = vmatprep.mubr.bf16.mxu0 0
  %607 = vmatmul.mubr.bf16.gmra.mxu0 %v551
  %v608 = vpop.f32.mrf.mxu0
  %v609 = vadd.f32 %v513, %v608
  %v610 = vpop.f32.mrf.mxu0
  %v611 = vpop.f32.mrf.mxu0
  %v612 = vadd.f32 %v513, %v611
  %v613 = vpop.f32.mrf.mxu0
  %614 = vmatprep.mubr.bf16.mxu0 0
  %615 = vmatmul.mubr.bf16.gmra.mxu0 %v554
  %v616 = vpop.f32.mrf.mxu0
  %v617 = vadd.f32 %v513, %v616
  %v618 = vpop.f32.mrf.mxu0
  %v619 = vpop.f32.mrf.mxu0
  %v620 = vadd.f32 %v513, %v619
  %v621 = vpop.f32.mrf.mxu0
  %622 = vmatprep.mubr.bf16.mxu0 0
  %623 = vmatmul.mubr.bf16.gmra.mxu0 %v557
  %v624 = vpop.f32.mrf.mxu0
  %v625 = vadd.f32 %v513, %v624
  %v626 = vpop.f32.mrf.mxu0
  %v627 = vpop.f32.mrf.mxu0
  %v628 = vadd.f32 %v513, %v627
  %v629 = vpop.f32.mrf.mxu0
  %630 = vmatprep.mubr.bf16.mxu0 0
  %631 = vmatmul.mubr.bf16.gmra.mxu0 %v560
  %v632 = vpop.f32.mrf.mxu0
  %v633 = vadd.f32 %v513, %v632
  %v634 = vpop.f32.mrf.mxu0
  %v635 = vpop.f32.mrf.mxu0
  %v636 = vadd.f32 %v513, %v635
  %v637 = vpop.f32.mrf.mxu0
  %638 = vmatprep.mubr.bf16.mxu0 0
  %639 = vmatmul.mubr.bf16.gmra.mxu0 %v563
  %v640 = vpop.f32.mrf.mxu0
  %v641 = vadd.f32 %v513, %v640
  %v642 = vpop.f32.mrf.mxu0
  %v643 = vpop.f32.mrf.mxu0
  %v644 = vadd.f32 %v513, %v643
  %v645 = vpop.f32.mrf.mxu0
  %646 = vmatprep.mubr.bf16.mxu0 0
  %647 = vmatmul.mubr.bf16.gmra.mxu0 %v566
  %v648 = vpop.f32.mrf.mxu0
  %v649 = vadd.f32 %v513, %v648
  %v650 = vpop.f32.mrf.mxu0
  %v651 = vpop.f32.mrf.mxu0
  %v652 = vadd.f32 %v513, %v651
  %v653 = vpop.f32.mrf.mxu0
  %654 = vmatprep.mubr.bf16.mxu0 0
  %655 = vmatmul.mubr.bf16.gmra.mxu0 %v569
  %v656 = vpop.f32.mrf.mxu0
  %v657 = vadd.f32 %v513, %v656
  %v658 = vpop.f32.mrf.mxu0
  %v659 = vpop.f32.mrf.mxu0
  %v660 = vadd.f32 %v513, %v659
  %v661 = vpop.f32.mrf.mxu0
  %662 = vmatprep.mubr.bf16.mxu0 0
  %663 = vmatmul.mubr.bf16.gmra.mxu0 %v572
  %v664 = vpop.f32.mrf.mxu0
  %v665 = vadd.f32 %v513, %v664
  %v666 = vpop.f32.mrf.mxu0
  %v667 = vpop.f32.mrf.mxu0
  %v668 = vadd.f32 %v513, %v667
  %v669 = vpop.f32.mrf.mxu0
  %670 = vdwg.mxu0
  %v671 = vxor.u32 %v609, 2147483648
  %v672 = vxor.u32 %v612, 2147483648
  %v673 = vxor.u32 %v617, 2147483648
  %v674 = vxor.u32 %v620, 2147483648
  %v675 = vxor.u32 %v625, 2147483648
  %v676 = vxor.u32 %v628, 2147483648
  %v677 = vxor.u32 %v633, 2147483648
  %v678 = vxor.u32 %v636, 2147483648
  %v679 = vxor.u32 %v641, 2147483648
  %v680 = vxor.u32 %v644, 2147483648
  %v681 = vxor.u32 %v649, 2147483648
  %v682 = vxor.u32 %v652, 2147483648
  %v683 = vxor.u32 %v657, 2147483648
  %v684 = vxor.u32 %v660, 2147483648
  %v685 = vxor.u32 %v665, 2147483648
  %v686 = vxor.u32 %v668, 2147483648
  %v687 = vmul.f32 %v671, 1.442695
  %v688 = vpow.pop %v687
  %v689 = vmul.f32 %v672, 1.442695
  %v690 = vpow.pop %v689
  %v691 = vmul.f32 %v673, 1.442695
  %v692 = vpow.pop %v691
  %v693 = vmul.f32 %v674, 1.442695
  %v694 = vpow.pop %v693
  %v695 = vmul.f32 %v675, 1.442695
  %v696 = vpow.pop %v695
  %v697 = vmul.f32 %v676, 1.442695
  %v698 = vpow.pop %v697
  %v699 = vmul.f32 %v677, 1.442695
  %v700 = vpow.pop %v699
  %v701 = vmul.f32 %v678, 1.442695
  %v702 = vpow.pop %v701
  %v703 = vmul.f32 %v679, 1.442695
  %v704 = vpow.pop %v703
  %v705 = vmul.f32 %v680, 1.442695
  %v706 = vpow.pop %v705
  %v707 = vmul.f32 %v681, 1.442695
  %v708 = vpow.pop %v707
  %v709 = vmul.f32 %v682, 1.442695
  %v710 = vpow.pop %v709
  %v711 = vmul.f32 %v683, 1.442695
  %v712 = vpow.pop %v711
  %v713 = vmul.f32 %v684, 1.442695
  %v714 = vpow.pop %v713
  %v715 = vmul.f32 %v685, 1.442695
  %v716 = vpow.pop %v715
  %v717 = vmul.f32 %v686, 1.442695
  %v718 = vpow.pop %v717
  %v719 = vadd.f32 %v688, 1.0
  %v720 = vadd.f32 %v690, 1.0
  %v721 = vadd.f32 %v692, 1.0
  %v722 = vadd.f32 %v694, 1.0
  %v723 = vadd.f32 %v696, 1.0
  %v724 = vadd.f32 %v698, 1.0
  %v725 = vadd.f32 %v700, 1.0
  %v726 = vadd.f32 %v702, 1.0
  %v727 = vadd.f32 %v704, 1.0
  %v728 = vadd.f32 %v706, 1.0
  %v729 = vadd.f32 %v708, 1.0
  %v730 = vadd.f32 %v710, 1.0
  %v731 = vadd.f32 %v712, 1.0
  %v732 = vadd.f32 %v714, 1.0
  %v733 = vadd.f32 %v716, 1.0
  %v734 = vadd.f32 %v718, 1.0
  %v735 = vrcp.pop %v719
  %v736 = vmul.f32 1.0, %v735
  %v737 = vrcp.pop %v720
  %v738 = vmul.f32 1.0, %v737
  %v739 = vrcp.pop %v721
  %v740 = vmul.f32 1.0, %v739
  %v741 = vrcp.pop %v722
  %v742 = vmul.f32 1.0, %v741
  %v743 = vrcp.pop %v723
  %v744 = vmul.f32 1.0, %v743
  %v745 = vrcp.pop %v724
  %v746 = vmul.f32 1.0, %v745
  %v747 = vrcp.pop %v725
  %v748 = vmul.f32 1.0, %v747
  %v749 = vrcp.pop %v726
  %v750 = vmul.f32 1.0, %v749
  %v751 = vrcp.pop %v727
  %v752 = vmul.f32 1.0, %v751
  %v753 = vrcp.pop %v728
  %v754 = vmul.f32 1.0, %v753
  %v755 = vrcp.pop %v729
  %v756 = vmul.f32 1.0, %v755
  %v757 = vrcp.pop %v730
  %v758 = vmul.f32 1.0, %v757
  %v759 = vrcp.pop %v731
  %v760 = vmul.f32 1.0, %v759
  %v761 = vrcp.pop %v732
  %v762 = vmul.f32 1.0, %v761
  %v763 = vrcp.pop %v733
  %v764 = vmul.f32 1.0, %v763
  %v765 = vrcp.pop %v734
  %v766 = vmul.f32 1.0, %v765
  %v767 = vtanh.pop %v609
  %v768 = vtanh.pop %v612
  %v769 = vtanh.pop %v617
  %v770 = vtanh.pop %v620
  %v771 = vtanh.pop %v625
  %v772 = vtanh.pop %v628
  %v773 = vtanh.pop %v633
  %v774 = vtanh.pop %v636
  %v775 = vtanh.pop %v641
  %v776 = vtanh.pop %v644
  %v777 = vtanh.pop %v649
  %v778 = vtanh.pop %v652
  %v779 = vtanh.pop %v657
  %v780 = vtanh.pop %v660
  %v781 = vtanh.pop %v665
  %v782 = vtanh.pop %v668
  %799 = vrot.lane.b32.xlu0 %v767, 64
  %v800 = vpop.permute.xlu0 %799
  %801 = vrot.lane.b32.xlu0 %v768, 64
  %v802 = vpop.permute.xlu0 %801
  %803 = vrot.lane.b32.xlu0 %v769, 64
  %v804 = vpop.permute.xlu0 %803
  %805 = vrot.lane.b32.xlu0 %v770, 64
  %v806 = vpop.permute.xlu0 %805
  %807 = vrot.lane.b32.xlu0 %v771, 64
  %v808 = vpop.permute.xlu0 %807
  %809 = vrot.lane.b32.xlu0 %v772, 64
  %v810 = vpop.permute.xlu0 %809
  %811 = vrot.lane.b32.xlu0 %v773, 64
  %v812 = vpop.permute.xlu0 %811
  %813 = vrot.lane.b32.xlu0 %v774, 64
  %v814 = vpop.permute.xlu0 %813
  %815 = vrot.lane.b32.xlu0 %v775, 64
  %v816 = vpop.permute.xlu0 %815
  %817 = vrot.lane.b32.xlu0 %v776, 64
  %v818 = vpop.permute.xlu0 %817
  %819 = vrot.lane.b32.xlu0 %v777, 64
  %v820 = vpop.permute.xlu0 %819
  %821 = vrot.lane.b32.xlu0 %v778, 64
  %v822 = vpop.permute.xlu0 %821
  %823 = vrot.lane.b32.xlu0 %v779, 64
  %v824 = vpop.permute.xlu0 %823
  %825 = vrot.lane.b32.xlu0 %v780, 64
  %v826 = vpop.permute.xlu0 %825
  %827 = vrot.lane.b32.xlu0 %v781, 64
  %v828 = vpop.permute.xlu0 %827
  %829 = vrot.lane.b32.xlu0 %v782, 64
  %v830 = vpop.permute.xlu0 %829
  %v847 = vmul.f32 %v736, %v800
  %v848 = vmul.f32 %v738, %v802
  %v849 = vmul.f32 %v740, %v804
  %v850 = vmul.f32 %v742, %v806
  %v851 = vmul.f32 %v744, %v808
  %v852 = vmul.f32 %v746, %v810
  %v853 = vmul.f32 %v748, %v812
  %v854 = vmul.f32 %v750, %v814
  %v855 = vmul.f32 %v752, %v816
  %v856 = vmul.f32 %v754, %v818
  %v857 = vmul.f32 %v756, %v820
  %v858 = vmul.f32 %v758, %v822
  %v859 = vmul.f32 %v760, %v824
  %v860 = vmul.f32 %v762, %v826
  %v861 = vmul.f32 %v764, %v828
  %v862 = vmul.f32 %v766, %v830
  %v863 = vtanh.pop %v847
  %v864 = vtanh.pop %v848
  %v865 = vtanh.pop %v849
  %v866 = vtanh.pop %v850
  %v867 = vtanh.pop %v851
  %v868 = vtanh.pop %v852
  %v869 = vtanh.pop %v853
  %v870 = vtanh.pop %v854
  %v871 = vtanh.pop %v855
  %v872 = vtanh.pop %v856
  %v873 = vtanh.pop %v857
  %v874 = vtanh.pop %v858
  %v875 = vtanh.pop %v859
  %v876 = vtanh.pop %v860
  %v877 = vtanh.pop %v861
  %v878 = vtanh.pop %v862
  %895 = vrot.lane.b32.xlu0 %v863, 32
  %v896 = vpop.permute.xlu0 %895
  %897 = vrot.lane.b32.xlu0 %v864, 32
  %v898 = vpop.permute.xlu0 %897
  %899 = vrot.lane.b32.xlu0 %v865, 32
  %v900 = vpop.permute.xlu0 %899
  %901 = vrot.lane.b32.xlu0 %v866, 32
  %v902 = vpop.permute.xlu0 %901
  %903 = vrot.lane.b32.xlu0 %v867, 32
  %v904 = vpop.permute.xlu0 %903
  %905 = vrot.lane.b32.xlu0 %v868, 32
  %v906 = vpop.permute.xlu0 %905
  %907 = vrot.lane.b32.xlu0 %v869, 32
  %v908 = vpop.permute.xlu0 %907
  %909 = vrot.lane.b32.xlu0 %v870, 32
  %v910 = vpop.permute.xlu0 %909
  %911 = vrot.lane.b32.xlu0 %v871, 32
  %v912 = vpop.permute.xlu0 %911
  %913 = vrot.lane.b32.xlu0 %v872, 32
  %v914 = vpop.permute.xlu0 %913
  %915 = vrot.lane.b32.xlu0 %v873, 32
  %v916 = vpop.permute.xlu0 %915
  %917 = vrot.lane.b32.xlu0 %v874, 32
  %v918 = vpop.permute.xlu0 %917
  %919 = vrot.lane.b32.xlu0 %v875, 32
  %v920 = vpop.permute.xlu0 %919
  %921 = vrot.lane.b32.xlu0 %v876, 32
  %v922 = vpop.permute.xlu0 %921
  %923 = vrot.lane.b32.xlu0 %v877, 32
  %v924 = vpop.permute.xlu0 %923
  %925 = vrot.lane.b32.xlu0 %v878, 32
  %v926 = vpop.permute.xlu0 %925
  %v943 = vmul.f32 %v736, %v896
  %v944 = vmul.f32 %v738, %v898
  %v945 = vmul.f32 %v740, %v900
  %v946 = vmul.f32 %v742, %v902
  %v947 = vmul.f32 %v744, %v904
  %v948 = vmul.f32 %v746, %v906
  %v949 = vmul.f32 %v748, %v908
  %v950 = vmul.f32 %v750, %v910
  %v951 = vmul.f32 %v752, %v912
  %v952 = vmul.f32 %v754, %v914
  %v953 = vmul.f32 %v756, %v916
  %v954 = vmul.f32 %v758, %v918
  %v955 = vmul.f32 %v760, %v920
  %v956 = vmul.f32 %v762, %v922
  %v957 = vmul.f32 %v764, %v924
  %v958 = vmul.f32 %v766, %v926
  %v959 = vld [vmem:[%s2 + $0x1] sm:$0x1]
  %v960 = vld [vmem:[%s2 + $0x2] sm:$0x1]
  %962 = vset.pattern.permute.xlu0 0
  %963 = vperm.xlu0 %962, %v960
  %v964 = vpop.permute.xlu0 %963
  %982 = vrot.lane.b32.xlu0 %v943, 96
  %v983 = vpop.permute.xlu0 %982
  %984 = vrot.lane.b32.xlu0 %v944, 96
  %v985 = vpop.permute.xlu0 %984
  %986 = vrot.lane.b32.xlu0 %v945, 96
  %v987 = vpop.permute.xlu0 %986
  %988 = vrot.lane.b32.xlu0 %v946, 96
  %v989 = vpop.permute.xlu0 %988
  %990 = vrot.lane.b32.xlu0 %v947, 96
  %v991 = vpop.permute.xlu0 %990
  %992 = vrot.lane.b32.xlu0 %v948, 96
  %v993 = vpop.permute.xlu0 %992
  %994 = vrot.lane.b32.xlu0 %v949, 96
  %v995 = vpop.permute.xlu0 %994
  %996 = vrot.lane.b32.xlu0 %v950, 96
  %v997 = vpop.permute.xlu0 %996
  %998 = vrot.lane.b32.xlu0 %v951, 96
  %v999 = vpop.permute.xlu0 %998
  %1000 = vrot.lane.b32.xlu0 %v952, 96
  %v1001 = vpop.permute.xlu0 %1000
  %1002 = vrot.lane.b32.xlu0 %v953, 96
  %v1003 = vpop.permute.xlu0 %1002
  %1004 = vrot.lane.b32.xlu0 %v954, 96
  %v1005 = vpop.permute.xlu0 %1004
  %1006 = vrot.lane.b32.xlu0 %v955, 96
  %v1007 = vpop.permute.xlu0 %1006
  %1008 = vrot.lane.b32.xlu0 %v956, 96
  %v1009 = vpop.permute.xlu0 %1008
  %1010 = vrot.lane.b32.xlu0 %v957, 96
  %v1011 = vpop.permute.xlu0 %1010
  %1012 = vrot.lane.b32.xlu0 %v958, 96
  %v1013 = vpop.permute.xlu0 %1012
  %v1015 = vsel %vm87, %v959, 0
  %v1017 = vsel %vm87, %v983, 0
  %v1019 = vsel %vm87, %v985, 0
  %v1021 = vsel %vm87, %v987, 0
  %v1023 = vsel %vm87, %v989, 0
  %v1025 = vsel %vm87, %v991, 0
  %v1027 = vsel %vm87, %v993, 0
  %v1029 = vsel %vm87, %v995, 0
  %v1031 = vsel %vm87, %v997, 0
  %v1033 = vsel %vm87, %v999, 0
  %v1035 = vsel %vm87, %v1001, 0
  %v1037 = vsel %vm87, %v1003, 0
  %v1039 = vsel %vm87, %v1005, 0
  %v1041 = vsel %vm87, %v1007, 0
  %v1043 = vsel %vm87, %v1009, 0
  %v1045 = vsel %vm87, %v1011, 0
  %v1047 = vsel %vm87, %v1013, 0
  %1049 = vmatprep.subr.mxu0 0.0
  %1050 = vmatpush1.xpose.msra.mxu0 %v1047
  %1051 = vmatprep.subr.mxu0 0.0
  %1052 = vmatpush1.xpose.msra.mxu0 %v1045
  %1053 = vmatprep.subr.mxu0 0.0
  %1054 = vmatpush1.xpose.msra.mxu0 %v1043
  %1055 = vmatprep.subr.mxu0 0.0
  %1056 = vmatpush1.xpose.msra.mxu0 %v1041
  %1057 = vmatprep.subr.mxu0 0.0
  %1058 = vmatpush1.xpose.msra.mxu0 %v1039
  %1059 = vmatprep.subr.mxu0 0.0
  %1060 = vmatpush1.xpose.msra.mxu0 %v1037
  %1061 = vmatprep.subr.mxu0 0.0
  %1062 = vmatpush1.xpose.msra.mxu0 %v1035
  %1063 = vmatprep.subr.mxu0 0.0
  %1064 = vmatpush1.xpose.msra.mxu0 %v1033
  %1065 = vmatprep.subr.mxu0 0.0
  %1066 = vmatpush1.xpose.msra.mxu0 %v1031
  %1067 = vmatprep.subr.mxu0 0.0
  %1068 = vmatpush1.xpose.msra.mxu0 %v1029
  %1069 = vmatprep.subr.mxu0 0.0
  %1070 = vmatpush1.xpose.msra.mxu0 %v1027
  %1071 = vmatprep.subr.mxu0 0.0
  %1072 = vmatpush1.xpose.msra.mxu0 %v1025
  %1073 = vmatprep.subr.mxu0 0.0
  %1074 = vmatpush1.xpose.msra.mxu0 %v1023
  %1075 = vmatprep.subr.mxu0 0.0
  %1076 = vmatpush1.xpose.msra.mxu0 %v1021
  %1077 = vmatprep.subr.mxu0 0.0
  %1078 = vmatpush1.xpose.msra.mxu0 %v1019
  %1079 = vmatprep.subr.mxu0 0.0
  %1080 = vmatpush1.xpose.msra.mxu0 %v1017
  %1081 = vmatprep.subr.mxu0 0.0
  %1082 = vmatpush2.xpose.msra.mxu0 0.0
  %1083 = vmatprep.subr.mxu0 0.0
  %1084 = vmatpush2.xpose.msra.mxu0 0.0
  %1085 = vmatprep.subr.mxu0 0.0
  %1086 = vmatpush2.xpose.msra.mxu0 0.0
  %1087 = vmatprep.subr.mxu0 0.0
  %1088 = vmatpush2.xpose.msra.mxu0 0.0
  %1089 = vmatprep.subr.mxu0 0.0
  %1090 = vmatpush2.xpose.msra.mxu0 0.0
  %1091 = vmatprep.subr.mxu0 0.0
  %1092 = vmatpush2.xpose.msra.mxu0 0.0
  %1093 = vmatprep.subr.mxu0 0.0
  %1094 = vmatpush2.xpose.msra.mxu0 0.0
  %1095 = vmatprep.subr.mxu0 0.0
  %1096 = vmatpush2.xpose.msra.mxu0 0.0
  %1097 = vmatprep.subr.mxu0 0.0
  %1098 = vmatpush2.xpose.msra.mxu0 0.0
  %1099 = vmatprep.subr.mxu0 0.0
  %1100 = vmatpush2.xpose.msra.mxu0 0.0
  %1101 = vmatprep.subr.mxu0 0.0
  %1102 = vmatpush2.xpose.msra.mxu0 0.0
  %1103 = vmatprep.subr.mxu0 0.0
  %1104 = vmatpush2.xpose.msra.mxu0 0.0
  %1105 = vmatprep.subr.mxu0 0.0
  %1106 = vmatpush2.xpose.msra.mxu0 0.0
  %1107 = vmatprep.subr.mxu0 0.0
  %1108 = vmatpush2.xpose.msra.mxu0 0.0
  %1109 = vmatprep.subr.mxu0 0.0
  %1110 = vmatpush2.xpose.msra.mxu0 0.0
  %1111 = vmatprep.subr.mxu0 0.0
  %1112 = vmatpush2.xpose.msra.mxu0 0.0
  %1113 = vmatprep.mubr.f32.mxu0 0.0
  %1114 = vmatmul.mubr.f32.gmra.mxu0 %v1015
  %v1115 = vpop.f32.mrf.mxu0
  %v1116 = vadd.f32 %v964, %v1115
  %v1117 = vpop.f32.mrf.mxu0
  %1118 = vdwg.mxu0
  %1119 = vst [vmem:[%s3] sm:$0x1] %v1116
  // Predicated region
  $region14: #{_forward_impl.1} parent=0 // pred_check
    _
  $region15: #{_forward_impl.1} parent=0 // pred_check_branch
    %1121 = sbr.rel (0) target = $region17
  $region16: #{_forward_impl.1} parent=0 // pred_region
    _
  $region17: #{_forward_impl.1} parent=0 // pred_fallthru
    _
  // Predicated region
  $region18: #{_forward_impl.1} parent=0 // pred_check
    _
  $region19: #{_forward_impl.1} parent=0 // pred_check_branch
    %1123 = sbr.rel (0) target = $region21
  $region20: #{_forward_impl.1} parent=0 // pred_region
    _
  $region21: #{_forward_impl.1} parent=0 // pred_fallthru
    _

</llo_original>
